<compile_context>
chip_gen: v6e
topology: v6e:2x2x1
jax: 0.10.0
libtpu: 0.0.40
codegen_flags: <defaults>
</compile_context>

<pallas_src>
import jax
import jax.numpy as jnp
from jax.experimental import pallas as pl
from jax.experimental.pallas import tpu as pltpu


def mlp_kernel(x_ref, w1_ref, b1_ref, w2_ref, b2_ref, o_ref):
    # x_ref: (tm, Ep), w1_ref: (Ep, Fp), b1_ref: (1, Fp) f32,
    # w2_ref: (Fp, Ep), b2_ref: (1, Ep) f32, o_ref: (tm, Ep)
    x = x_ref[...].astype(w1_ref.dtype)           # bf16 MXU inputs when weights are bf16
    h = jnp.dot(x, w1_ref[...], preferred_element_type=jnp.float32)
    h = jnp.maximum(h + b1_ref[...], 0.0)         # bias + ReLU in f32
    # TODO(synk): dropout=None -> Identity in the reference module; nothing to do here.
    y = jnp.dot(h.astype(w2_ref.dtype), w2_ref[...],
                preferred_element_type=jnp.float32)
    y = y + b2_ref[...]
    o_ref[...] = y.astype(o_ref.dtype)


def _round_up(n, m):
    return pl.cdiv(n, m) * m


def mlp_forward(x, w1_t, b1, w2_t, b2, *, tile_rows=256, weight_dtype=None,
                vmem_limit_bytes=64 * 1024 * 1024):
    """x: (B, S, E). w1_t: (E, F), b1: (F,), w2_t: (F, E), b2: (E,).

    Weights arrive pre-transposed so both matmuls are plain row-major x @ W.
    weight_dtype=jnp.bfloat16 stores weights in bf16 (f32 accumulation kept).
    """
    B, S, E = x.shape
    F = w1_t.shape[1]
    N = B * S

    if weight_dtype is not None:
        w1_t = w1_t.astype(weight_dtype)
        w2_t = w2_t.astype(weight_dtype)

    # Lane-dense feature padding (multiples of 128) + row padding (multiple of
    # tile_rows). Zero padding is exact: padded K rows/cols contribute 0, and
    # padded output rows/cols are sliced off below.
    tile_rows = max(8, _round_up(tile_rows, 8))
    Ep = _round_up(E, 128)
    Fp = _round_up(F, 128)
    Np = _round_up(N, tile_rows)
    # Keep tile_rows * Fp * 4B (f32 intermediate h) to a few MB: don't grow
    # tile_rows past ~512 for ViT-sized F without chunking the hidden dim.

    x2d = jnp.pad(x.reshape(N, E), ((0, Np - N), (0, Ep - E)))
    w1p = jnp.pad(w1_t, ((0, Ep - E), (0, Fp - F)))
    w2p = jnp.pad(w2_t, ((0, Fp - F), (0, Ep - E)))
    b1p = jnp.pad(b1.astype(jnp.float32), (0, Fp - F)).reshape(1, Fp)
    b2p = jnp.pad(b2.astype(jnp.float32), (0, Ep - E)).reshape(1, Ep)

    grid = (Np // tile_rows,)

    out2d = pl.pallas_call(
        mlp_kernel,
        out_shape=jax.ShapeDtypeStruct((Np, Ep), x.dtype),
        grid_spec=pltpu.PrefetchScalarGridSpec(
            num_scalar_prefetch=0,
            grid=grid,
            in_specs=[
                pl.BlockSpec((tile_rows, Ep), lambda i: (i, 0)),   # x row tile
                pl.BlockSpec((Ep, Fp), lambda i: (0, 0)),          # W1^T (grid-invariant)
                pl.BlockSpec((1, Fp), lambda i: (0, 0)),           # b1
                pl.BlockSpec((Fp, Ep), lambda i: (0, 0)),          # W2^T (grid-invariant)
                pl.BlockSpec((1, Ep), lambda i: (0, 0)),           # b2
            ],
            out_specs=pl.BlockSpec((tile_rows, Ep), lambda i: (i, 0)),
        ),
        compiler_params=pltpu.CompilerParams(
            dimension_semantics=("parallel",),   # row tiles shard across v7x TCs
            vmem_limit_bytes=vmem_limit_bytes,   # > default scoped limit (16/32 MiB)
        ),
    )(x2d, w1p, b1p, w2p, b2p)

    return out2d[:N, :E].reshape(B, S, E)


def xavier_uniform(key, fan_out, fan_in, dtype=jnp.float32):
    # matches nn.init.xavier_uniform_ for a (fan_out, fan_in) Linear weight
    limit = (6.0 / (fan_in + fan_out)) ** 0.5
    return jax.random.uniform(key, (fan_out, fan_in), dtype, minval=-limit, maxval=limit)


if __name__ == "__main__":
    embed_dim = 32
    dim_feedforward = 64
    batch, seq = 2, 8

    key = jax.random.PRNGKey(0)
    k_x, k_w1, k_b1, k_w2, k_b2 = jax.random.split(key, 5)

    x = jax.random.normal(k_x, (batch, seq, embed_dim), jnp.float32)

    # Parameters mirroring the module's _reset_parameters:
    # linear1.weight: (F, E) xavier_uniform; biases ~ N(mean=1e-6, std=1)
    w1 = xavier_uniform(k_w1, dim_feedforward, embed_dim)
    b1 = jax.random.normal(k_b1, (dim_feedforward,), jnp.float32) + 1e-6
    w2 = xavier_uniform(k_w2, embed_dim, dim_feedforward)
    b2 = jax.random.normal(k_b2, (embed_dim,), jnp.float32) + 1e-6

    # Kernel consumes weights pre-transposed so matmuls are plain x @ W.
    w1_t = w1.T  # (E, F)
    w2_t = w2.T  # (F, E)

    # Pure-JAX reference (same semantics as the PyTorch forward, dropout=None).
    ref = jnp.maximum(x @ w1.T + b1, 0.0) @ w2.T + b2

    # f32 weights: tight correctness check.
    out_f32 = mlp_forward(x, w1_t, b1, w2_t, b2, tile_rows=256)
    out_f32 = jax.block_until_ready(out_f32)
    assert out_f32.shape == (batch, seq, embed_dim)
    assert jnp.allclose(out_f32, ref, atol=1e-5, rtol=1e-5)

    # bf16 weights (native MXU input dtype) with f32 accumulation: loose check.
    out_bf16 = mlp_forward(x, w1_t, b1, w2_t, b2, tile_rows=256,
                           weight_dtype=jnp.bfloat16)
    out_bf16 = jax.block_until_ready(out_bf16)
    assert out_bf16.shape == (batch, seq, embed_dim)
    assert jnp.allclose(out_bf16, ref, atol=1e-1, rtol=5e-2)

    print("KERNEL_OK")
</pallas_src>

<mosaic_0001>
module attributes {stable_mosaic.version = 11 : i64} {
  func.func @mlp_kernel(%arg0: i32, %arg1: memref<256x128xf32, #tpu.memory_space<vmem>>, %arg2: memref<128x128xf32, #tpu.memory_space<vmem>>, %arg3: memref<1x128xf32, #tpu.memory_space<vmem>>, %arg4: memref<128x128xf32, #tpu.memory_space<vmem>>, %arg5: memref<1x128xf32, #tpu.memory_space<vmem>>, %arg6: memref<256x128xf32, #tpu.memory_space<vmem>>) attributes {dimension_semantics = [#tpu.dimension_semantics<parallel>], iteration_bounds = array<i64: 1>, scalar_prefetch = 0 : i64, scratch_operands = 0 : i64, tpu.core_type = #tpu.core_type<tc>, window_params = [{transform_indices = @transform_0, window_bounds = array<i64: 256, 128>}, {pipeline_mode = #tpu.pipeline_mode<synchronous>, transform_indices = @transform_1, window_bounds = array<i64: 128, 128>}, {pipeline_mode = #tpu.pipeline_mode<synchronous>, transform_indices = @transform_2, window_bounds = array<i64: 1, 128>}, {pipeline_mode = #tpu.pipeline_mode<synchronous>, transform_indices = @transform_3, window_bounds = array<i64: 128, 128>}, {pipeline_mode = #tpu.pipeline_mode<synchronous>, transform_indices = @transform_4, window_bounds = array<i64: 1, 128>}, {transform_indices = @transform_5, window_bounds = array<i64: 256, 128>}]} {
    %c0 = arith.constant 0 : index
    %c0_0 = arith.constant 0 : index
    %0 = vector.load %arg1[%c0, %c0_0] : memref<256x128xf32, #tpu.memory_space<vmem>>, vector<256x128xf32>
    %c0_1 = arith.constant 0 : index
    %c0_2 = arith.constant 0 : index
    %1 = vector.load %arg2[%c0_1, %c0_2] : memref<128x128xf32, #tpu.memory_space<vmem>>, vector<128x128xf32>
    %cst = arith.constant dense<0.000000e+00> : vector<256x128xf32>
    %2 = tpu.matmul %0, %1, %cst {dimension_numbers = #tpu.dot_dimension_numbers<[1], [0], [0], [1], [0, 0, 1, 1], [], []>} : vector<256x128xf32>, vector<128x128xf32>, vector<256x128xf32> -> vector<256x128xf32>
    %c0_3 = arith.constant 0 : index
    %c0_4 = arith.constant 0 : index
    %3 = vector.load %arg3[%c0_3, %c0_4] : memref<1x128xf32, #tpu.memory_space<vmem>>, vector<1x128xf32>
    %4 = vector.broadcast %3 : vector<1x128xf32> to vector<256x128xf32>
    %5 = arith.addf %2, %4 : vector<256x128xf32>
    %cst_5 = arith.constant 0.000000e+00 : f32
    %6 = vector.broadcast %cst_5 : f32 to vector<256x128xf32>
    %7 = arith.maximumf %5, %6 : vector<256x128xf32>
    %c0_6 = arith.constant 0 : index
    %c0_7 = arith.constant 0 : index
    %8 = vector.load %arg4[%c0_6, %c0_7] : memref<128x128xf32, #tpu.memory_space<vmem>>, vector<128x128xf32>
    %cst_8 = arith.constant dense<0.000000e+00> : vector<256x128xf32>
    %9 = tpu.matmul %7, %8, %cst_8 {dimension_numbers = #tpu.dot_dimension_numbers<[1], [0], [0], [1], [0, 0, 1, 1], [], []>} : vector<256x128xf32>, vector<128x128xf32>, vector<256x128xf32> -> vector<256x128xf32>
    %c0_9 = arith.constant 0 : index
    %c0_10 = arith.constant 0 : index
    %10 = vector.load %arg5[%c0_9, %c0_10] : memref<1x128xf32, #tpu.memory_space<vmem>>, vector<1x128xf32>
    %11 = vector.broadcast %10 : vector<1x128xf32> to vector<256x128xf32>
    %12 = arith.addf %9, %11 : vector<256x128xf32>
    %c0_11 = arith.constant 0 : index
    %c0_12 = arith.constant 0 : index
    %13 = vector.load %arg6[%c0_11, %c0_12] : memref<256x128xf32, #tpu.memory_space<vmem>>, vector<256x128xf32>
    tpu.vector_store %arg6[%c0_11, %c0_12], %12 {strides = array<i32>} : memref<256x128xf32, #tpu.memory_space<vmem>>, vector<256x128xf32>,
    return
  }
  func.func @transform_0(%arg0: i32) -> (i32, i32) {
    %c0_i32 = arith.constant 0 : i32
    %c0_i32_0 = arith.constant 0 : i32
    return %arg0, %c0_i32 : i32, i32
  }
  func.func @transform_1(%arg0: i32) -> (i32, i32) {
    %c0_i32 = arith.constant 0 : i32
    %c0_i32_0 = arith.constant 0 : i32
    %c0_i32_1 = arith.constant 0 : i32
    return %c0_i32, %c0_i32_0 : i32, i32
  }
  func.func @transform_2(%arg0: i32) -> (i32, i32) {
    %c0_i32 = arith.constant 0 : i32
    %c0_i32_0 = arith.constant 0 : i32
    %c0_i32_1 = arith.constant 0 : i32
    return %c0_i32, %c0_i32_0 : i32, i32
  }
  func.func @transform_3(%arg0: i32) -> (i32, i32) {
    %c0_i32 = arith.constant 0 : i32
    %c0_i32_0 = arith.constant 0 : i32
    %c0_i32_1 = arith.constant 0 : i32
    return %c0_i32, %c0_i32_0 : i32, i32
  }
  func.func @transform_4(%arg0: i32) -> (i32, i32) {
    %c0_i32 = arith.constant 0 : i32
    %c0_i32_0 = arith.constant 0 : i32
    %c0_i32_1 = arith.constant 0 : i32
    return %c0_i32, %c0_i32_0 : i32, i32
  }
  func.func @transform_5(%arg0: i32) -> (i32, i32) {
    %c0_i32 = arith.constant 0 : i32
    %c0_i32_0 = arith.constant 0 : i32
    return %arg0, %c0_i32 : i32, i32
  }
}

</mosaic_0001>

<llo_original>
// kernel: tpu_custom_call.1
$region0: #{tpu_custom_call.1}
  #allocation0 [shape = 'u32[]', space=smem, size = 0x4, offset = 0x4, fixed_abs, tag = 'smem constant byte address 0x4 - core index']
  #allocation1 [shape = 'u32[144,128]{1,0:T(1,128)}', space=vmem, size = 0x12000, scoped, tag = 'internal scratch']
  %s0 = inlined_call_operand.hbm [shape: f32[256,128], index: 0, kind: input, shape index: {}]
  %s1 = inlined_call_operand.hbm [shape: f32[128,128], index: 1, kind: input, shape index: {}]
  %s2 = inlined_call_operand.vmem [shape: f32[1,128], index: 2, kind: input, shape index: {}]
  %s3 = inlined_call_operand.hbm [shape: f32[128,128], index: 3, kind: input, shape index: {}]
  %s4 = inlined_call_operand.vmem [shape: f32[1,128], index: 4, kind: input, shape index: {}]
  %s5 = inlined_call_operand.hbm [shape: f32[256,128], index: 5, kind: output, shape index: {}]
  %s6 = sld [smem:[#allocation0]]
  $region42: #{tpu_custom_call.1} parent=0
    _
  %s8 = ssub.s32 1, %s6
  %s9 = scalar_select 0, %s8, %s6
  $region1: #{tpu_custom_call.1} parent=0
    #allocation2 [shape = 'u8[131072]{0}', space=vmem, size = 0x20000, scoped, tag = 'input window, operand 0, single buffered']
    #allocation3 [shape = 's32[1]{0}', space=sflag, size = 0x4, scoped, tag = 'scoped memory for tpu_custom_call.1']
    #allocation4 [shape = 's32[1]{0}', space=sflag, size = 0x4, scoped, tag = 'scoped memory for tpu_custom_call.1']
    #allocation5 [shape = 'u8[65536]{0}', space=vmem, size = 0x10000, scoped, tag = 'input window, operand 1, single buffered']
    #allocation6 [shape = 's32[1]{0}', space=sflag, size = 0x4, scoped, tag = 'scoped memory for tpu_custom_call.1']
    #allocation7 [shape = 'u8[65536]{0}', space=vmem, size = 0x10000, scoped, tag = 'input window, operand 3, single buffered']
    #allocation8 [shape = 'u8[131072]{0}', space=vmem, size = 0x20000, scoped, tag = 'output window, operand 0, single buffered']
    %10 = vsyncpa [#allocation3], 0
    %11 = vsyncpa [#allocation6], 0
    %12 = vsyncpa [#allocation4], 0
    // Predicated region
    $region2: #{tpu_custom_call.1} parent=1 // pred_check
      _
    $region3: #{tpu_custom_call.1} parent=1 // pred_check_branch
      %14 = sbr.rel (0) target = $region5
    $region4: #{tpu_custom_call.1} parent=1 // pred_region
      %s16 = ssub.s32 4096, 4096
      %17 = vsyncadd [#allocation3], %s16
      %s18 = sshll.u32 [#allocation2], 4
      %s19 = int_to_ptr.vmem [resolvable:$true] %s18
      %24 = dma.hbm_to_vmem [thread:$0]  %s0, 4096, %s19, [#allocation3], 128, 128, 8
    $region5: #{tpu_custom_call.1} parent=1 // pred_fallthru
      _
    // Predicated region
    $region6: #{tpu_custom_call.1} parent=1 // pred_check
      _
    $region7: #{tpu_custom_call.1} parent=1 // pred_check_branch
      %26 = sbr.rel (0) target = $region9
    $region8: #{tpu_custom_call.1} parent=1 // pred_region
      %s28 = ssub.s32 2048, 2048
      %29 = vsyncadd [#allocation6], %s28
      %s30 = sshll.u32 [#allocation5], 4
      %s31 = int_to_ptr.vmem [resolvable:$true] %s30
      %36 = dma.hbm_to_vmem [thread:$0]  %s1, 2048, %s31, [#allocation6], 128, 128, 8
    $region9: #{tpu_custom_call.1} parent=1 // pred_fallthru
      _
    // Predicated region
    $region10: #{tpu_custom_call.1} parent=1 // pred_check
      _
    $region11: #{tpu_custom_call.1} parent=1 // pred_check_branch
      %38 = sbr.rel (0) target = $region13
    $region12: #{tpu_custom_call.1} parent=1 // pred_region
      _
    $region13: #{tpu_custom_call.1} parent=1 // pred_fallthru
      _
    // Predicated region
    $region14: #{tpu_custom_call.1} parent=1 // pred_check
      _
    $region15: #{tpu_custom_call.1} parent=1 // pred_check_branch
      %40 = sbr.rel (0) target = $region17
    $region16: #{tpu_custom_call.1} parent=1 // pred_region
      %s42 = ssub.s32 2048, 2048
      %43 = vsyncadd [#allocation6], %s42
      %s44 = sshll.u32 [#allocation7], 4
      %s45 = int_to_ptr.vmem [resolvable:$true] %s44
      %50 = dma.hbm_to_vmem [thread:$0]  %s3, 2048, %s45, [#allocation6], 128, 128, 8
    $region17: #{tpu_custom_call.1} parent=1 // pred_fallthru
      _
    // Predicated region
    $region18: #{tpu_custom_call.1} parent=1 // pred_check
      _
    $region19: #{tpu_custom_call.1} parent=1 // pred_check_branch
      %52 = sbr.rel (0) target = $region21
    $region20: #{tpu_custom_call.1} parent=1 // pred_region
      _
    $region21: #{tpu_custom_call.1} parent=1 // pred_fallthru
      _
    // Predicated region
    $region22: #{tpu_custom_call.1} parent=1 // pred_check
      _
    $region23: #{tpu_custom_call.1} parent=1 // pred_check_branch
      %54 = sbr.rel (0) target = $region25
    $region24: #{tpu_custom_call.1} parent=1 // pred_region
      %55 = dma.done [#allocation3], 4096
    $region25: #{tpu_custom_call.1} parent=1 // pred_fallthru
      _
    // Predicated region
    $region26: #{tpu_custom_call.1} parent=1 // pred_check
      _
    $region27: #{tpu_custom_call.1} parent=1 // pred_check_branch
      %57 = sbr.rel (0) target = $region29
    $region28: #{tpu_custom_call.1} parent=1 // pred_region
      %58 = dma.done [#allocation6], 2048
    $region29: #{tpu_custom_call.1} parent=1 // pred_fallthru
      _
    // Predicated region
    $region30: #{tpu_custom_call.1} parent=1 // pred_check
      _
    $region31: #{tpu_custom_call.1} parent=1 // pred_check_branch
      %60 = sbr.rel (0) target = $region33
    $region32: #{tpu_custom_call.1} parent=1 // pred_region
      %61 = dma.done [#allocation6], 2048
    $region33: #{tpu_custom_call.1} parent=1 // pred_fallthru
      _
    %v62 = vld [vmem:[#allocation2] sm:$0xff]
    %v63 = vld [vmem:[#allocation2 + $0x8] sm:$0xff]
    %v64 = vld [vmem:[#allocation2 + $0x10] sm:$0xff]
    %v65 = vld [vmem:[#allocation2 + $0x18] sm:$0xff]
    %v66 = vld [vmem:[#allocation2 + $0x20] sm:$0xff]
    %v67 = vld [vmem:[#allocation2 + $0x28] sm:$0xff]
    %v68 = vld [vmem:[#allocation2 + $0x30] sm:$0xff]
    %v69 = vld [vmem:[#allocation2 + $0x38] sm:$0xff]
    %v70 = vld [vmem:[#allocation2 + $0x40] sm:$0xff]
    %v71 = vld [vmem:[#allocation2 + $0x48] sm:$0xff]
    %v72 = vld [vmem:[#allocation2 + $0x50] sm:$0xff]
    %v73 = vld [vmem:[#allocation2 + $0x58] sm:$0xff]
    %v74 = vld [vmem:[#allocation2 + $0x60] sm:$0xff]
    %v75 = vld [vmem:[#allocation2 + $0x68] sm:$0xff]
    %v76 = vld [vmem:[#allocation2 + $0x70] sm:$0xff]
    %v77 = vld [vmem:[#allocation2 + $0x78] sm:$0xff]
    %v78 = vld [vmem:[#allocation2 + $0x80] sm:$0xff]
    %v79 = vld [vmem:[#allocation2 + $0x88] sm:$0xff]
    %v80 = vld [vmem:[#allocation2 + $0x90] sm:$0xff]
    %v81 = vld [vmem:[#allocation2 + $0x98] sm:$0xff]
    %v82 = vld [vmem:[#allocation2 + $0xa0] sm:$0xff]
    %v83 = vld [vmem:[#allocation2 + $0xa8] sm:$0xff]
    %v84 = vld [vmem:[#allocation2 + $0xb0] sm:$0xff]
    %v85 = vld [vmem:[#allocation2 + $0xb8] sm:$0xff]
    %v86 = vld [vmem:[#allocation2 + $0xc0] sm:$0xff]
    %v87 = vld [vmem:[#allocation2 + $0xc8] sm:$0xff]
    %v88 = vld [vmem:[#allocation2 + $0xd0] sm:$0xff]
    %v89 = vld [vmem:[#allocation2 + $0xd8] sm:$0xff]
    %v90 = vld [vmem:[#allocation2 + $0xe0] sm:$0xff]
    %v91 = vld [vmem:[#allocation2 + $0xe8] sm:$0xff]
    %v92 = vld [vmem:[#allocation2 + $0xf0] sm:$0xff]
    %v93 = vld [vmem:[#allocation2 + $0xf8] sm:$0xff]
    %v94 = vld [vmem:[#allocation5] sm:$0xff]
    %v95 = vld [vmem:[#allocation5 + $0x8] sm:$0xff]
    %v96 = vld [vmem:[#allocation5 + $0x10] sm:$0xff]
    %v97 = vld [vmem:[#allocation5 + $0x18] sm:$0xff]
    %v98 = vld [vmem:[#allocation5 + $0x20] sm:$0xff]
    %v99 = vld [vmem:[#allocation5 + $0x28] sm:$0xff]
    %v100 = vld [vmem:[#allocation5 + $0x30] sm:$0xff]
    %v101 = vld [vmem:[#allocation5 + $0x38] sm:$0xff]
    %v102 = vld [vmem:[#allocation5 + $0x40] sm:$0xff]
    %v103 = vld [vmem:[#allocation5 + $0x48] sm:$0xff]
    %v104 = vld [vmem:[#allocation5 + $0x50] sm:$0xff]
    %v105 = vld [vmem:[#allocation5 + $0x58] sm:$0xff]
    %v106 = vld [vmem:[#allocation5 + $0x60] sm:$0xff]
    %v107 = vld [vmem:[#allocation5 + $0x68] sm:$0xff]
    %v108 = vld [vmem:[#allocation5 + $0x70] sm:$0xff]
    %v109 = vld [vmem:[#allocation5 + $0x78] sm:$0xff]
    %v110 = vld [vmem:[%s2] sm:$0x1]
    %v112 = vlaneseq
    %v113 = vshrl.u32 %v112, 7
    %v114 = vsub.s32 0, %v113
    %v115 = vrot.slane %v110, %v114
    %117 = vmatprep.subr.mxu0 0.0
    %118 = vmatpush1.msra.mxu0 %v109
    %119 = vmatprep.subr.mxu0 0.0
    %120 = vmatpush1.msra.mxu0 %v108
    %121 = vmatprep.subr.mxu0 0.0
    %122 = vmatpush1.msra.mxu0 %v107
    %123 = vmatprep.subr.mxu0 0.0
    %124 = vmatpush1.msra.mxu0 %v106
    %125 = vmatprep.subr.mxu0 0.0
    %126 = vmatpush1.msra.mxu0 %v105
    %127 = vmatprep.subr.mxu0 0.0
    %128 = vmatpush1.msra.mxu0 %v104
    %129 = vmatprep.subr.mxu0 0.0
    %130 = vmatpush1.msra.mxu0 %v103
    %131 = vmatprep.subr.mxu0 0.0
    %132 = vmatpush1.msra.mxu0 %v102
    %133 = vmatprep.subr.mxu0 0.0
    %134 = vmatpush1.msra.mxu0 %v101
    %135 = vmatprep.subr.mxu0 0.0
    %136 = vmatpush1.msra.mxu0 %v100
    %137 = vmatprep.subr.mxu0 0.0
    %138 = vmatpush1.msra.mxu0 %v99
    %139 = vmatprep.subr.mxu0 0.0
    %140 = vmatpush1.msra.mxu0 %v98
    %141 = vmatprep.subr.mxu0 0.0
    %142 = vmatpush1.msra.mxu0 %v97
    %143 = vmatprep.subr.mxu0 0.0
    %144 = vmatpush1.msra.mxu0 %v96
    %145 = vmatprep.subr.mxu0 0.0
    %146 = vmatpush1.msra.mxu0 %v95
    %147 = vmatprep.subr.mxu0 0.0
    %148 = vmatpush1.msra.mxu0 %v94
    %149 = vmatprep.subr.mxu0 0.0
    %150 = vmatpush2.msra.mxu0 0.0
    %151 = vmatprep.subr.mxu0 0.0
    %152 = vmatpush2.msra.mxu0 0.0
    %153 = vmatprep.subr.mxu0 0.0
    %154 = vmatpush2.msra.mxu0 0.0
    %155 = vmatprep.subr.mxu0 0.0
    %156 = vmatpush2.msra.mxu0 0.0
    %157 = vmatprep.subr.mxu0 0.0
    %158 = vmatpush2.msra.mxu0 0.0
    %159 = vmatprep.subr.mxu0 0.0
    %160 = vmatpush2.msra.mxu0 0.0
    %161 = vmatprep.subr.mxu0 0.0
    %162 = vmatpush2.msra.mxu0 0.0
    %163 = vmatprep.subr.mxu0 0.0
    %164 = vmatpush2.msra.mxu0 0.0
    %165 = vmatprep.subr.mxu0 0.0
    %166 = vmatpush2.msra.mxu0 0.0
    %167 = vmatprep.subr.mxu0 0.0
    %168 = vmatpush2.msra.mxu0 0.0
    %169 = vmatprep.subr.mxu0 0.0
    %170 = vmatpush2.msra.mxu0 0.0
    %171 = vmatprep.subr.mxu0 0.0
    %172 = vmatpush2.msra.mxu0 0.0
    %173 = vmatprep.subr.mxu0 0.0
    %174 = vmatpush2.msra.mxu0 0.0
    %175 = vmatprep.subr.mxu0 0.0
    %176 = vmatpush2.msra.mxu0 0.0
    %177 = vmatprep.subr.mxu0 0.0
    %178 = vmatpush2.msra.mxu0 0.0
    %179 = vmatprep.subr.mxu0 0.0
    %180 = vmatpush2.msra.mxu0 0.0
    %181 = vmatprep.mubr.f32.mxu0 0.0
    %182 = vmatmul.mubr.f32.gmra.mxu0 %v62
    %v183 = vpop.f32.mrf.mxu0
    %v184 = vadd.f32 %v115, %v183
    %v185 = vpop.f32.mrf.mxu0
    %186 = vmatprep.mubr.f32.mxu0 0.0
    %187 = vmatmul.mubr.f32.gmra.mxu0 %v63
    %v188 = vpop.f32.mrf.mxu0
    %v189 = vadd.f32 %v115, %v188
    %v190 = vpop.f32.mrf.mxu0
    %191 = vmatprep.mubr.f32.mxu0 0.0
    %192 = vmatmul.mubr.f32.gmra.mxu0 %v64
    %v193 = vpop.f32.mrf.mxu0
    %v194 = vadd.f32 %v115, %v193
    %v195 = vpop.f32.mrf.mxu0
    %196 = vmatprep.mubr.f32.mxu0 0.0
    %197 = vmatmul.mubr.f32.gmra.mxu0 %v65
    %v198 = vpop.f32.mrf.mxu0
    %v199 = vadd.f32 %v115, %v198
    %v200 = vpop.f32.mrf.mxu0
    %201 = vmatprep.mubr.f32.mxu0 0.0
    %202 = vmatmul.mubr.f32.gmra.mxu0 %v66
    %v203 = vpop.f32.mrf.mxu0
    %v204 = vadd.f32 %v115, %v203
    %v205 = vpop.f32.mrf.mxu0
    %206 = vmatprep.mubr.f32.mxu0 0.0
    %207 = vmatmul.mubr.f32.gmra.mxu0 %v67
    %v208 = vpop.f32.mrf.mxu0
    %v209 = vadd.f32 %v115, %v208
    %v210 = vpop.f32.mrf.mxu0
    %211 = vmatprep.mubr.f32.mxu0 0.0
    %212 = vmatmul.mubr.f32.gmra.mxu0 %v68
    %v213 = vpop.f32.mrf.mxu0
    %v214 = vadd.f32 %v115, %v213
    %v215 = vpop.f32.mrf.mxu0
    %216 = vmatprep.mubr.f32.mxu0 0.0
    %217 = vmatmul.mubr.f32.gmra.mxu0 %v69
    %v218 = vpop.f32.mrf.mxu0
    %v219 = vadd.f32 %v115, %v218
    %v220 = vpop.f32.mrf.mxu0
    %221 = vmatprep.mubr.f32.mxu0 0.0
    %222 = vmatmul.mubr.f32.gmra.mxu0 %v70
    %v223 = vpop.f32.mrf.mxu0
    %v224 = vadd.f32 %v115, %v223
    %v225 = vpop.f32.mrf.mxu0
    %226 = vmatprep.mubr.f32.mxu0 0.0
    %227 = vmatmul.mubr.f32.gmra.mxu0 %v71
    %v228 = vpop.f32.mrf.mxu0
    %v229 = vadd.f32 %v115, %v228
    %v230 = vpop.f32.mrf.mxu0
    %231 = vmatprep.mubr.f32.mxu0 0.0
    %232 = vmatmul.mubr.f32.gmra.mxu0 %v72
    %v233 = vpop.f32.mrf.mxu0
    %v234 = vadd.f32 %v115, %v233
    %v235 = vpop.f32.mrf.mxu0
    %236 = vmatprep.mubr.f32.mxu0 0.0
    %237 = vmatmul.mubr.f32.gmra.mxu0 %v73
    %v238 = vpop.f32.mrf.mxu0
    %v239 = vadd.f32 %v115, %v238
    %v240 = vpop.f32.mrf.mxu0
    %241 = vmatprep.mubr.f32.mxu0 0.0
    %242 = vmatmul.mubr.f32.gmra.mxu0 %v74
    %v243 = vpop.f32.mrf.mxu0
    %v244 = vadd.f32 %v115, %v243
    %v245 = vpop.f32.mrf.mxu0
    %246 = vmatprep.mubr.f32.mxu0 0.0
    %247 = vmatmul.mubr.f32.gmra.mxu0 %v75
    %v248 = vpop.f32.mrf.mxu0
    %v249 = vadd.f32 %v115, %v248
    %v250 = vpop.f32.mrf.mxu0
    %251 = vmatprep.mubr.f32.mxu0 0.0
    %252 = vmatmul.mubr.f32.gmra.mxu0 %v76
    %v253 = vpop.f32.mrf.mxu0
    %v254 = vadd.f32 %v115, %v253
    %v255 = vpop.f32.mrf.mxu0
    %256 = vmatprep.mubr.f32.mxu0 0.0
    %257 = vmatmul.mubr.f32.gmra.mxu0 %v77
    %v258 = vpop.f32.mrf.mxu0
    %v259 = vadd.f32 %v115, %v258
    %v260 = vpop.f32.mrf.mxu0
    %261 = vmatprep.mubr.f32.mxu0 0.0
    %262 = vmatmul.mubr.f32.gmra.mxu0 %v78
    %v263 = vpop.f32.mrf.mxu0
    %v264 = vadd.f32 %v115, %v263
    %v265 = vpop.f32.mrf.mxu0
    %266 = vmatprep.mubr.f32.mxu0 0.0
    %267 = vmatmul.mubr.f32.gmra.mxu0 %v79
    %v268 = vpop.f32.mrf.mxu0
    %v269 = vadd.f32 %v115, %v268
    %v270 = vpop.f32.mrf.mxu0
    %271 = vmatprep.mubr.f32.mxu0 0.0
    %272 = vmatmul.mubr.f32.gmra.mxu0 %v80
    %v273 = vpop.f32.mrf.mxu0
    %v274 = vadd.f32 %v115, %v273
    %v275 = vpop.f32.mrf.mxu0
    %276 = vmatprep.mubr.f32.mxu0 0.0
    %277 = vmatmul.mubr.f32.gmra.mxu0 %v81
    %v278 = vpop.f32.mrf.mxu0
    %v279 = vadd.f32 %v115, %v278
    %v280 = vpop.f32.mrf.mxu0
    %281 = vmatprep.mubr.f32.mxu0 0.0
    %282 = vmatmul.mubr.f32.gmra.mxu0 %v82
    %v283 = vpop.f32.mrf.mxu0
    %v284 = vadd.f32 %v115, %v283
    %v285 = vpop.f32.mrf.mxu0
    %286 = vmatprep.mubr.f32.mxu0 0.0
    %287 = vmatmul.mubr.f32.gmra.mxu0 %v83
    %v288 = vpop.f32.mrf.mxu0
    %v289 = vadd.f32 %v115, %v288
    %v290 = vpop.f32.mrf.mxu0
    %291 = vmatprep.mubr.f32.mxu0 0.0
    %292 = vmatmul.mubr.f32.gmra.mxu0 %v84
    %v293 = vpop.f32.mrf.mxu0
    %v294 = vadd.f32 %v115, %v293
    %v295 = vpop.f32.mrf.mxu0
    %296 = vmatprep.mubr.f32.mxu0 0.0
    %297 = vmatmul.mubr.f32.gmra.mxu0 %v85
    %v298 = vpop.f32.mrf.mxu0
    %v299 = vadd.f32 %v115, %v298
    %v300 = vpop.f32.mrf.mxu0
    %301 = vmatprep.mubr.f32.mxu0 0.0
    %302 = vmatmul.mubr.f32.gmra.mxu0 %v86
    %v303 = vpop.f32.mrf.mxu0
    %v304 = vadd.f32 %v115, %v303
    %v305 = vpop.f32.mrf.mxu0
    %306 = vmatprep.mubr.f32.mxu0 0.0
    %307 = vmatmul.mubr.f32.gmra.mxu0 %v87
    %v308 = vpop.f32.mrf.mxu0
    %v309 = vadd.f32 %v115, %v308
    %v310 = vpop.f32.mrf.mxu0
    %311 = vmatprep.mubr.f32.mxu0 0.0
    %312 = vmatmul.mubr.f32.gmra.mxu0 %v88
    %v313 = vpop.f32.mrf.mxu0
    %v314 = vadd.f32 %v115, %v313
    %v315 = vpop.f32.mrf.mxu0
    %316 = vmatprep.mubr.f32.mxu0 0.0
    %317 = vmatmul.mubr.f32.gmra.mxu0 %v89
    %v318 = vpop.f32.mrf.mxu0
    %v319 = vadd.f32 %v115, %v318
    %v320 = vpop.f32.mrf.mxu0
    %321 = vmatprep.mubr.f32.mxu0 0.0
    %322 = vmatmul.mubr.f32.gmra.mxu0 %v90
    %v323 = vpop.f32.mrf.mxu0
    %v324 = vadd.f32 %v115, %v323
    %v325 = vpop.f32.mrf.mxu0
    %326 = vmatprep.mubr.f32.mxu0 0.0
    %327 = vmatmul.mubr.f32.gmra.mxu0 %v91
    %v328 = vpop.f32.mrf.mxu0
    %v329 = vadd.f32 %v115, %v328
    %v330 = vpop.f32.mrf.mxu0
    %331 = vmatprep.mubr.f32.mxu0 0.0
    %332 = vmatmul.mubr.f32.gmra.mxu0 %v92
    %v333 = vpop.f32.mrf.mxu0
    %v334 = vadd.f32 %v115, %v333
    %v335 = vpop.f32.mrf.mxu0
    %336 = vmatprep.mubr.f32.mxu0 0.0
    %337 = vmatmul.mubr.f32.gmra.mxu0 %v93
    %v338 = vpop.f32.mrf.mxu0
    %v339 = vadd.f32 %v115, %v338
    %v340 = vpop.f32.mrf.mxu0
    %341 = vdwg.mxu0
    %v342 = vmax.f32 %v184, 0.0
    %v343 = vmax.f32 %v189, 0.0
    %v344 = vmax.f32 %v194, 0.0
    %v345 = vmax.f32 %v199, 0.0
    %v346 = vmax.f32 %v204, 0.0
    %v347 = vmax.f32 %v209, 0.0
    %v348 = vmax.f32 %v214, 0.0
    %v349 = vmax.f32 %v219, 0.0
    %v350 = vmax.f32 %v224, 0.0
    %v351 = vmax.f32 %v229, 0.0
    %v352 = vmax.f32 %v234, 0.0
    %v353 = vmax.f32 %v239, 0.0
    %v354 = vmax.f32 %v244, 0.0
    %v355 = vmax.f32 %v249, 0.0
    %v356 = vmax.f32 %v254, 0.0
    %v357 = vmax.f32 %v259, 0.0
    %v358 = vmax.f32 %v264, 0.0
    %v359 = vmax.f32 %v269, 0.0
    %v360 = vmax.f32 %v274, 0.0
    %v361 = vmax.f32 %v279, 0.0
    %v362 = vmax.f32 %v284, 0.0
    %v363 = vmax.f32 %v289, 0.0
    %v364 = vmax.f32 %v294, 0.0
    %v365 = vmax.f32 %v299, 0.0
    %v366 = vmax.f32 %v304, 0.0
    %v367 = vmax.f32 %v309, 0.0
    %v368 = vmax.f32 %v314, 0.0
    %v369 = vmax.f32 %v319, 0.0
    %v370 = vmax.f32 %v324, 0.0
    %v371 = vmax.f32 %v329, 0.0
    %v372 = vmax.f32 %v334, 0.0
    %v373 = vmax.f32 %v339, 0.0
    %v374 = vld [vmem:[#allocation7] sm:$0xff]
    %v375 = vld [vmem:[#allocation7 + $0x8] sm:$0xff]
    %v376 = vld [vmem:[#allocation7 + $0x10] sm:$0xff]
    %v377 = vld [vmem:[#allocation7 + $0x18] sm:$0xff]
    %v378 = vld [vmem:[#allocation7 + $0x20] sm:$0xff]
    %v379 = vld [vmem:[#allocation7 + $0x28] sm:$0xff]
    %v380 = vld [vmem:[#allocation7 + $0x30] sm:$0xff]
    %v381 = vld [vmem:[#allocation7 + $0x38] sm:$0xff]
    %v382 = vld [vmem:[#allocation7 + $0x40] sm:$0xff]
    %v383 = vld [vmem:[#allocation7 + $0x48] sm:$0xff]
    %v384 = vld [vmem:[#allocation7 + $0x50] sm:$0xff]
    %v385 = vld [vmem:[#allocation7 + $0x58] sm:$0xff]
    %v386 = vld [vmem:[#allocation7 + $0x60] sm:$0xff]
    %v387 = vld [vmem:[#allocation7 + $0x68] sm:$0xff]
    %v388 = vld [vmem:[#allocation7 + $0x70] sm:$0xff]
    %v389 = vld [vmem:[#allocation7 + $0x78] sm:$0xff]
    %v390 = vld [vmem:[%s4] sm:$0x1]
    %v392 = vlaneseq
    %v393 = vshrl.u32 %v392, 7
    %v394 = vsub.s32 0, %v393
    %v395 = vrot.slane %v390, %v394
    %397 = vmatprep.subr.mxu0 0.0
    %398 = vmatpush1.msra.mxu0 %v389
    %399 = vmatprep.subr.mxu0 0.0
    %400 = vmatpush1.msra.mxu0 %v388
    %401 = vmatprep.subr.mxu0 0.0
    %402 = vmatpush1.msra.mxu0 %v387
    %403 = vmatprep.subr.mxu0 0.0
    %404 = vmatpush1.msra.mxu0 %v386
    %405 = vmatprep.subr.mxu0 0.0
    %406 = vmatpush1.msra.mxu0 %v385
    %407 = vmatprep.subr.mxu0 0.0
    %408 = vmatpush1.msra.mxu0 %v384
    %409 = vmatprep.subr.mxu0 0.0
    %410 = vmatpush1.msra.mxu0 %v383
    %411 = vmatprep.subr.mxu0 0.0
    %412 = vmatpush1.msra.mxu0 %v382
    %413 = vmatprep.subr.mxu0 0.0
    %414 = vmatpush1.msra.mxu0 %v381
    %415 = vmatprep.subr.mxu0 0.0
    %416 = vmatpush1.msra.mxu0 %v380
    %417 = vmatprep.subr.mxu0 0.0
    %418 = vmatpush1.msra.mxu0 %v379
    %419 = vmatprep.subr.mxu0 0.0
    %420 = vmatpush1.msra.mxu0 %v378
    %421 = vmatprep.subr.mxu0 0.0
    %422 = vmatpush1.msra.mxu0 %v377
    %423 = vmatprep.subr.mxu0 0.0
    %424 = vmatpush1.msra.mxu0 %v376
    %425 = vmatprep.subr.mxu0 0.0
    %426 = vmatpush1.msra.mxu0 %v375
    %427 = vmatprep.subr.mxu0 0.0
    %428 = vmatpush1.msra.mxu0 %v374
    %429 = vmatprep.subr.mxu0 0.0
    %430 = vmatpush2.msra.mxu0 0.0
    %431 = vmatprep.subr.mxu0 0.0
    %432 = vmatpush2.msra.mxu0 0.0
    %433 = vmatprep.subr.mxu0 0.0
    %434 = vmatpush2.msra.mxu0 0.0
    %435 = vmatprep.subr.mxu0 0.0
    %436 = vmatpush2.msra.mxu0 0.0
    %437 = vmatprep.subr.mxu0 0.0
    %438 = vmatpush2.msra.mxu0 0.0
    %439 = vmatprep.subr.mxu0 0.0
    %440 = vmatpush2.msra.mxu0 0.0
    %441 = vmatprep.subr.mxu0 0.0
    %442 = vmatpush2.msra.mxu0 0.0
    %443 = vmatprep.subr.mxu0 0.0
    %444 = vmatpush2.msra.mxu0 0.0
    %445 = vmatprep.subr.mxu0 0.0
    %446 = vmatpush2.msra.mxu0 0.0
    %447 = vmatprep.subr.mxu0 0.0
    %448 = vmatpush2.msra.mxu0 0.0
    %449 = vmatprep.subr.mxu0 0.0
    %450 = vmatpush2.msra.mxu0 0.0
    %451 = vmatprep.subr.mxu0 0.0
    %452 = vmatpush2.msra.mxu0 0.0
    %453 = vmatprep.subr.mxu0 0.0
    %454 = vmatpush2.msra.mxu0 0.0
    %455 = vmatprep.subr.mxu0 0.0
    %456 = vmatpush2.msra.mxu0 0.0
    %457 = vmatprep.subr.mxu0 0.0
    %458 = vmatpush2.msra.mxu0 0.0
    %459 = vmatprep.subr.mxu0 0.0
    %460 = vmatpush2.msra.mxu0 0.0
    %461 = vmatprep.mubr.f32.mxu0 0.0
    %462 = vmatmul.mubr.f32.gmra.mxu0 %v342
    %v463 = vpop.f32.mrf.mxu0
    %v464 = vadd.f32 %v395, %v463
    %v465 = vpop.f32.mrf.mxu0
    %466 = vmatprep.mubr.f32.mxu0 0.0
    %467 = vmatmul.mubr.f32.gmra.mxu0 %v343
    %v468 = vpop.f32.mrf.mxu0
    %v469 = vadd.f32 %v395, %v468
    %v470 = vpop.f32.mrf.mxu0
    %471 = vmatprep.mubr.f32.mxu0 0.0
    %472 = vmatmul.mubr.f32.gmra.mxu0 %v344
    %v473 = vpop.f32.mrf.mxu0
    %v474 = vadd.f32 %v395, %v473
    %v475 = vpop.f32.mrf.mxu0
    %476 = vmatprep.mubr.f32.mxu0 0.0
    %477 = vmatmul.mubr.f32.gmra.mxu0 %v345
    %v478 = vpop.f32.mrf.mxu0
    %v479 = vadd.f32 %v395, %v478
    %v480 = vpop.f32.mrf.mxu0
    %481 = vmatprep.mubr.f32.mxu0 0.0
    %482 = vmatmul.mubr.f32.gmra.mxu0 %v346
    %v483 = vpop.f32.mrf.mxu0
    %v484 = vadd.f32 %v395, %v483
    %v485 = vpop.f32.mrf.mxu0
    %486 = vmatprep.mubr.f32.mxu0 0.0
    %487 = vmatmul.mubr.f32.gmra.mxu0 %v347
    %v488 = vpop.f32.mrf.mxu0
    %v489 = vadd.f32 %v395, %v488
    %v490 = vpop.f32.mrf.mxu0
    %491 = vmatprep.mubr.f32.mxu0 0.0
    %492 = vmatmul.mubr.f32.gmra.mxu0 %v348
    %v493 = vpop.f32.mrf.mxu0
    %v494 = vadd.f32 %v395, %v493
    %v495 = vpop.f32.mrf.mxu0
    %496 = vmatprep.mubr.f32.mxu0 0.0
    %497 = vmatmul.mubr.f32.gmra.mxu0 %v349
    %v498 = vpop.f32.mrf.mxu0
    %v499 = vadd.f32 %v395, %v498
    %v500 = vpop.f32.mrf.mxu0
    %501 = vmatprep.mubr.f32.mxu0 0.0
    %502 = vmatmul.mubr.f32.gmra.mxu0 %v350
    %v503 = vpop.f32.mrf.mxu0
    %v504 = vadd.f32 %v395, %v503
    %v505 = vpop.f32.mrf.mxu0
    %506 = vmatprep.mubr.f32.mxu0 0.0
    %507 = vmatmul.mubr.f32.gmra.mxu0 %v351
    %v508 = vpop.f32.mrf.mxu0
    %v509 = vadd.f32 %v395, %v508
    %v510 = vpop.f32.mrf.mxu0
    %511 = vmatprep.mubr.f32.mxu0 0.0
    %512 = vmatmul.mubr.f32.gmra.mxu0 %v352
    %v513 = vpop.f32.mrf.mxu0
    %v514 = vadd.f32 %v395, %v513
    %v515 = vpop.f32.mrf.mxu0
    %516 = vmatprep.mubr.f32.mxu0 0.0
    %517 = vmatmul.mubr.f32.gmra.mxu0 %v353
    %v518 = vpop.f32.mrf.mxu0
    %v519 = vadd.f32 %v395, %v518
    %v520 = vpop.f32.mrf.mxu0
    %521 = vmatprep.mubr.f32.mxu0 0.0
    %522 = vmatmul.mubr.f32.gmra.mxu0 %v354
    %v523 = vpop.f32.mrf.mxu0
    %v524 = vadd.f32 %v395, %v523
    %v525 = vpop.f32.mrf.mxu0
    %526 = vmatprep.mubr.f32.mxu0 0.0
    %527 = vmatmul.mubr.f32.gmra.mxu0 %v355
    %v528 = vpop.f32.mrf.mxu0
    %v529 = vadd.f32 %v395, %v528
    %v530 = vpop.f32.mrf.mxu0
    %531 = vmatprep.mubr.f32.mxu0 0.0
    %532 = vmatmul.mubr.f32.gmra.mxu0 %v356
    %v533 = vpop.f32.mrf.mxu0
    %v534 = vadd.f32 %v395, %v533
    %v535 = vpop.f32.mrf.mxu0
    %536 = vmatprep.mubr.f32.mxu0 0.0
    %537 = vmatmul.mubr.f32.gmra.mxu0 %v357
    %v538 = vpop.f32.mrf.mxu0
    %v539 = vadd.f32 %v395, %v538
    %v540 = vpop.f32.mrf.mxu0
    %541 = vmatprep.mubr.f32.mxu0 0.0
    %542 = vmatmul.mubr.f32.gmra.mxu0 %v358
    %v543 = vpop.f32.mrf.mxu0
    %v544 = vadd.f32 %v395, %v543
    %v545 = vpop.f32.mrf.mxu0
    %546 = vmatprep.mubr.f32.mxu0 0.0
    %547 = vmatmul.mubr.f32.gmra.mxu0 %v359
    %v548 = vpop.f32.mrf.mxu0
    %v549 = vadd.f32 %v395, %v548
    %v550 = vpop.f32.mrf.mxu0
    %551 = vmatprep.mubr.f32.mxu0 0.0
    %552 = vmatmul.mubr.f32.gmra.mxu0 %v360
    %v553 = vpop.f32.mrf.mxu0
    %v554 = vadd.f32 %v395, %v553
    %v555 = vpop.f32.mrf.mxu0
    %556 = vmatprep.mubr.f32.mxu0 0.0
    %557 = vmatmul.mubr.f32.gmra.mxu0 %v361
    %v558 = vpop.f32.mrf.mxu0
    %v559 = vadd.f32 %v395, %v558
    %v560 = vpop.f32.mrf.mxu0
    %561 = vmatprep.mubr.f32.mxu0 0.0
    %562 = vmatmul.mubr.f32.gmra.mxu0 %v362
    %v563 = vpop.f32.mrf.mxu0
    %v564 = vadd.f32 %v395, %v563
    %v565 = vpop.f32.mrf.mxu0
    %566 = vmatprep.mubr.f32.mxu0 0.0
    %567 = vmatmul.mubr.f32.gmra.mxu0 %v363
    %v568 = vpop.f32.mrf.mxu0
    %v569 = vadd.f32 %v395, %v568
    %v570 = vpop.f32.mrf.mxu0
    %571 = vmatprep.mubr.f32.mxu0 0.0
    %572 = vmatmul.mubr.f32.gmra.mxu0 %v364
    %v573 = vpop.f32.mrf.mxu0
    %v574 = vadd.f32 %v395, %v573
    %v575 = vpop.f32.mrf.mxu0
    %576 = vmatprep.mubr.f32.mxu0 0.0
    %577 = vmatmul.mubr.f32.gmra.mxu0 %v365
    %v578 = vpop.f32.mrf.mxu0
    %v579 = vadd.f32 %v395, %v578
    %v580 = vpop.f32.mrf.mxu0
    %581 = vmatprep.mubr.f32.mxu0 0.0
    %582 = vmatmul.mubr.f32.gmra.mxu0 %v366
    %v583 = vpop.f32.mrf.mxu0
    %v584 = vadd.f32 %v395, %v583
    %v585 = vpop.f32.mrf.mxu0
    %586 = vmatprep.mubr.f32.mxu0 0.0
    %587 = vmatmul.mubr.f32.gmra.mxu0 %v367
    %v588 = vpop.f32.mrf.mxu0
    %v589 = vadd.f32 %v395, %v588
    %v590 = vpop.f32.mrf.mxu0
    %591 = vmatprep.mubr.f32.mxu0 0.0
    %592 = vmatmul.mubr.f32.gmra.mxu0 %v368
    %v593 = vpop.f32.mrf.mxu0
    %v594 = vadd.f32 %v395, %v593
    %v595 = vpop.f32.mrf.mxu0
    %596 = vmatprep.mubr.f32.mxu0 0.0
    %597 = vmatmul.mubr.f32.gmra.mxu0 %v369
    %v598 = vpop.f32.mrf.mxu0
    %v599 = vadd.f32 %v395, %v598
    %v600 = vpop.f32.mrf.mxu0
    %601 = vmatprep.mubr.f32.mxu0 0.0
    %602 = vmatmul.mubr.f32.gmra.mxu0 %v370
    %v603 = vpop.f32.mrf.mxu0
    %v604 = vadd.f32 %v395, %v603
    %v605 = vpop.f32.mrf.mxu0
    %606 = vmatprep.mubr.f32.mxu0 0.0
    %607 = vmatmul.mubr.f32.gmra.mxu0 %v371
    %v608 = vpop.f32.mrf.mxu0
    %v609 = vadd.f32 %v395, %v608
    %v610 = vpop.f32.mrf.mxu0
    %611 = vmatprep.mubr.f32.mxu0 0.0
    %612 = vmatmul.mubr.f32.gmra.mxu0 %v372
    %v613 = vpop.f32.mrf.mxu0
    %v614 = vadd.f32 %v395, %v613
    %v615 = vpop.f32.mrf.mxu0
    %616 = vmatprep.mubr.f32.mxu0 0.0
    %617 = vmatmul.mubr.f32.gmra.mxu0 %v373
    %v618 = vpop.f32.mrf.mxu0
    %v619 = vadd.f32 %v395, %v618
    %v620 = vpop.f32.mrf.mxu0
    %621 = vdwg.mxu0
    %622 = vst [vmem:[#allocation8] sm:$0xff] %v464
    %623 = vst [vmem:[#allocation8 + $0x8] sm:$0xff] %v469
    %624 = vst [vmem:[#allocation8 + $0x10] sm:$0xff] %v474
    %625 = vst [vmem:[#allocation8 + $0x18] sm:$0xff] %v479
    %626 = vst [vmem:[#allocation8 + $0x20] sm:$0xff] %v484
    %627 = vst [vmem:[#allocation8 + $0x28] sm:$0xff] %v489
    %628 = vst [vmem:[#allocation8 + $0x30] sm:$0xff] %v494
    %629 = vst [vmem:[#allocation8 + $0x38] sm:$0xff] %v499
    %630 = vst [vmem:[#allocation8 + $0x40] sm:$0xff] %v504
    %631 = vst [vmem:[#allocation8 + $0x48] sm:$0xff] %v509
    %632 = vst [vmem:[#allocation8 + $0x50] sm:$0xff] %v514
    %633 = vst [vmem:[#allocation8 + $0x58] sm:$0xff] %v519
    %634 = vst [vmem:[#allocation8 + $0x60] sm:$0xff] %v524
    %635 = vst [vmem:[#allocation8 + $0x68] sm:$0xff] %v529
    %636 = vst [vmem:[#allocation8 + $0x70] sm:$0xff] %v534
    %637 = vst [vmem:[#allocation8 + $0x78] sm:$0xff] %v539
    %638 = vst [vmem:[#allocation8 + $0x80] sm:$0xff] %v544
    %639 = vst [vmem:[#allocation8 + $0x88] sm:$0xff] %v549
    %640 = vst [vmem:[#allocation8 + $0x90] sm:$0xff] %v554
    %641 = vst [vmem:[#allocation8 + $0x98] sm:$0xff] %v559
    %642 = vst [vmem:[#allocation8 + $0xa0] sm:$0xff] %v564
    %643 = vst [vmem:[#allocation8 + $0xa8] sm:$0xff] %v569
    %644 = vst [vmem:[#allocation8 + $0xb0] sm:$0xff] %v574
    %645 = vst [vmem:[#allocation8 + $0xb8] sm:$0xff] %v579
    %646 = vst [vmem:[#allocation8 + $0xc0] sm:$0xff] %v584
    %647 = vst [vmem:[#allocation8 + $0xc8] sm:$0xff] %v589
    %648 = vst [vmem:[#allocation8 + $0xd0] sm:$0xff] %v594
    %649 = vst [vmem:[#allocation8 + $0xd8] sm:$0xff] %v599
    %650 = vst [vmem:[#allocation8 + $0xe0] sm:$0xff] %v604
    %651 = vst [vmem:[#allocation8 + $0xe8] sm:$0xff] %v609
    %652 = vst [vmem:[#allocation8 + $0xf0] sm:$0xff] %v614
    %653 = vst [vmem:[#allocation8 + $0xf8] sm:$0xff] %v619
    // Predicated region
    $region34: #{tpu_custom_call.1} parent=1 // pred_check
      _
    $region35: #{tpu_custom_call.1} parent=1 // pred_check_branch
      %655 = sbr.rel (0) target = $region37
    $region36: #{tpu_custom_call.1} parent=1 // pred_region
      %s657 = ssub.s32 4096, 4096
      %658 = vsyncadd [#allocation4], %s657
      %s659 = sshll.u32 [#allocation8], 4
      %s660 = int_to_ptr.vmem [resolvable:$true] %s659
      %665 = dma.vmem_to_hbm [thread:$0]  %s660, 4096, %s5, [#allocation4], 128, 128, 8
    $region37: #{tpu_custom_call.1} parent=1 // pred_fallthru
      _
    // Predicated region
    $region38: #{tpu_custom_call.1} parent=1 // pred_check
      _
    $region39: #{tpu_custom_call.1} parent=1 // pred_check_branch
      %667 = sbr.rel (0) target = $region41
    $region40: #{tpu_custom_call.1} parent=1 // pred_region
      %668 = dma.done [#allocation4], 4096
    $region41: #{tpu_custom_call.1} parent=1 // pred_fallthru
      _
    %669 = vsyncpa [#allocation3], 1
    %670 = vsyncpa [#allocation6], 1
    %671 = vsyncpa [#allocation4], 1

</llo_original>
